<compile_context>
chip_gen: v6e
topology: v6e:2x2x1
jax: 0.10.0
libtpu: 0.0.40
codegen_flags: <defaults>
</compile_context>

<pallas_src>
import functools

import jax
import jax.numpy as jnp
from jax.experimental import pallas as pl
from jax.experimental.pallas import tpu as pltpu

LANE = 128


def _round_up(x, m):
    return -(-x // m) * m


# ----------------------------------------------------------------------------
# Fused Pallas kernel
# ----------------------------------------------------------------------------
def _gct_fused_kernel(x_ref, emb_w_ref, emb_b_ref, agcn_w_ref, agcn_b_ref,
                      head_w_ref, head_b_ref,
                      cur_ref, h_ref, o_ref, *, n_layers):
    """One chunk of Tb (batch*time) slices, all activations as 2-D slabs.

    x_ref:      (Tb, N*Cin)      f32   raw inputs
    emb_w_ref:  (N*Cin, N*C)     f32   block-diagonal embedding matrix
    emb_b_ref:  (1, N*C)         f32
    agcn_w_ref: (L, N*C, N*C)    bf16  per-layer folded graph-conv matrices
    agcn_b_ref: (L, 1, N*C)      f32
    head_w_ref: (N*C, Dp)        bf16  block-diagonal head, zero-padded to Dp lanes
    head_b_ref: (1, Dp)          f32
    cur_ref:    (Tb, N*C)        f32   data-embedding output (current_inputs)
    h_ref:      (Tb, N*C)        f32   AGCN stack output (h_expert)
    o_ref:      (Tb, Dp)         f32   head output (o_expert, lane-padded)
    """
    # --- data embedding (tiny contraction, exact f32) -----------------------
    cur = (jnp.dot(x_ref[...], emb_w_ref[...],
                   preferred_element_type=jnp.float32) + emb_b_ref[...])
    cur_ref[...] = cur.astype(cur_ref.dtype)

    # --- AGCN stack: one big bf16 MXU matmul per layer, f32 accumulation ----
    h = cur
    for l in range(n_layers):          # n_layers is static -> fully unrolled
        h = (jnp.dot(h.astype(jnp.bfloat16), agcn_w_ref[l],
                     preferred_element_type=jnp.float32) + agcn_b_ref[l])
    h_ref[...] = h.astype(h_ref.dtype)

    # --- output head (block-diagonal per-node linear d_model -> dim_out) ----
    o = (jnp.dot(h.astype(jnp.bfloat16), head_w_ref[...],
                 preferred_element_type=jnp.float32) + head_b_ref[...])
    o_ref[...] = o.astype(o_ref.dtype)


def _pick_bt_tile(bt, nc, n_dout_pad):
    """Rows per grid step: as large as fits a conservative VMEM slice."""
    # Double-buffered f32 activation bytes per row (input x is negligible).
    row_bytes = 2 * 4 * (2 * nc + n_dout_pad)
    budget = 24 * 1024 * 1024
    cap = max(8, (budget // max(row_bytes, 1)) // 8 * 8)
    for cand in (1024, 512, 256):
        if bt >= cand and cand <= cap:
            return cand
    return min(_round_up(max(bt, 1), 8), cap)


def gct_fused_forward(x_flat, emb_w, emb_b, agcn_w, agcn_b, head_w, head_b,
                      *, tile_bt):
    """x_flat: (BT_pad, N*Cin); returns (cur, h, o_padded) flattened slabs."""
    bt_pad, n_cin = x_flat.shape
    nc = emb_w.shape[1]
    n_dout_pad = head_w.shape[1]
    n_layers = agcn_w.shape[0]
    assert bt_pad % tile_bt == 0
    grid = (bt_pad // tile_bt,)

    flops = 2 * bt_pad * (n_cin * nc + n_layers * nc * nc + nc * n_dout_pad)
    bytes_accessed = (4 * bt_pad * (n_cin + 2 * nc + n_dout_pad)
                      + 4 * (emb_w.size + emb_b.size + agcn_b.size + head_b.size)
                      + 2 * (agcn_w.size + head_w.size))

    kernel = functools.partial(_gct_fused_kernel, n_layers=n_layers)
    return pl.pallas_call(
        kernel,
        out_shape=(
            jax.ShapeDtypeStruct((bt_pad, nc), jnp.float32),         # current_inputs
            jax.ShapeDtypeStruct((bt_pad, nc), jnp.float32),         # h_expert
            jax.ShapeDtypeStruct((bt_pad, n_dout_pad), jnp.float32), # o_expert (padded)
        ),
        grid=grid,
        in_specs=[
            pl.BlockSpec((tile_bt, n_cin), lambda i: (i, 0)),
            pl.BlockSpec((n_cin, nc), lambda i: (0, 0)),             # resident
            pl.BlockSpec((1, nc), lambda i: (0, 0)),                 # resident
            pl.BlockSpec((n_layers, nc, nc), lambda i: (0, 0, 0)),   # resident
            pl.BlockSpec((n_layers, 1, nc), lambda i: (0, 0, 0)),    # resident
            pl.BlockSpec((nc, n_dout_pad), lambda i: (0, 0)),        # resident
            pl.BlockSpec((1, n_dout_pad), lambda i: (0, 0)),         # resident
        ],
        out_specs=(
            pl.BlockSpec((tile_bt, nc), lambda i: (i, 0)),
            pl.BlockSpec((tile_bt, nc), lambda i: (i, 0)),
            pl.BlockSpec((tile_bt, n_dout_pad), lambda i: (i, 0)),
        ),
        compiler_params=pltpu.CompilerParams(
            dimension_semantics=("parallel",),
            vmem_limit_bytes=32 * 1024 * 1024,
        ),
        cost_estimate=pl.CostEstimate(
            flops=flops, transcendentals=0, bytes_accessed=bytes_accessed),
    )(x_flat, emb_w, emb_b, agcn_w, agcn_b, head_w, head_b)


# ----------------------------------------------------------------------------
# Glue (plain JAX): Chebyshev supports, weight folding, parameters
# ----------------------------------------------------------------------------
def build_support_set(supports, cheb_k):
    """Exactly mirrors AGCN.forward's support_set construction."""
    support_set = []
    for s in supports:
        ks = [jnp.eye(s.shape[0], dtype=s.dtype), s]
        for _ in range(2, cheb_k):
            ks.append(2.0 * s @ ks[-1] - ks[-2])
        support_set.extend(ks)
    return jnp.stack(support_set, axis=0)      # (num_supports * cheb_k, N, N)


@functools.partial(jax.jit, static_argnames=("cheb_k", "tile_bt"))
def _gct_forward_jit(x_flat, supports, emb_w_big, emb_b_big, agcn_w_stack,
                     agcn_b_big, head_w_big, head_b_big, *, cheb_k, tile_bt):
    """Fold graph supports into per-layer matrices, then run the fused kernel."""
    supp_stack = build_support_set(list(supports), cheb_k)        # (K, N, N)
    k_total, n, _ = supp_stack.shape
    n_layers, kc, c = agcn_w_stack.shape
    assert kc == k_total * c, "AGCN weight shape assumes len(supports)*cheb_k supports"
    # concat_k(S_k @ X) @ W == X_flat @ M  (W reshape is support-major/channel-minor,
    # matching torch.cat(x_g, dim=-1) ordering).
    w4 = agcn_w_stack.reshape(n_layers, k_total, c, c)
    agcn_w_big = jnp.einsum('knm,lkco->lmcno', supp_stack, w4).reshape(
        n_layers, n * c, n * c).astype(jnp.bfloat16)
    return gct_fused_forward(x_flat, emb_w_big, emb_b_big, agcn_w_big,
                             agcn_b_big, head_w_big, head_b_big, tile_bt=tile_bt)


def xavier_normal(key, shape):
    fan_in, fan_out = shape[0], shape[1]
    std = (2.0 / (fan_in + fan_out)) ** 0.5
    return std * jax.random.normal(key, shape, dtype=jnp.float32)


class GCTblockEncPallas:
    def __init__(self, key, num_nodes, dim_in, dim_out, cheb_k, d_model,
                 seq_len, out_len, b_layers, top_k, d_ff, num_kernels):
        self.num_nodes = num_nodes
        self.input_dim = dim_in
        self.output_dim = dim_out
        self.cheb_k = cheb_k
        self.d_model = d_model
        self.seq_len = seq_len
        self.out_len = out_len
        self.b_layers = b_layers

        keys = jax.random.split(key, 2 + b_layers)
        # TODO(synk): DataEmbedding_SE definition unavailable; linear embedding used.
        self.w_emb = xavier_normal(keys[0], (dim_in, d_model))
        self.b_emb = jnp.zeros((d_model,), jnp.float32)
        # AGCN parameters, shape exactly as in AGCN.__init__ with dim_in = d_model.
        self.agcn_w = [xavier_normal(keys[1 + l], (2 * cheb_k * d_model, d_model))
                       for l in range(b_layers)]
        self.agcn_b = [jnp.zeros((d_model,), jnp.float32) for _ in range(b_layers)]
        # TODO(synk): Expert_seg definition unavailable; linear head d_model->dim_out.
        self.w_out = xavier_normal(keys[-1], (d_model, dim_out))
        self.b_out = jnp.zeros((dim_out,), jnp.float32)

        # --- fold support-independent params into kernel-ready matrices -----
        n, c, dout, cin = num_nodes, d_model, dim_out, dim_in
        eye_n = jnp.eye(n, dtype=jnp.float32)
        # block-diagonal embedding:  E[n*Cin+c, m*C+d] = I[n,m] * w_emb[c,d]
        self.emb_w_big = jnp.einsum('nm,cd->ncmd', eye_n, self.w_emb).reshape(
            n * cin, n * c)
        self.emb_b_big = jnp.tile(self.b_emb, n).reshape(1, n * c)
        # block-diagonal head:  H[n*C+c, m*Do+o] = I[n,m] * w_out[c,o],
        # zero-padded along the output lane axis to a multiple of 128 so the
        # o_expert writeback is a lane-dense (unmasked) store.
        self.n_dout = n * dout
        self.n_dout_pad = max(LANE, _round_up(self.n_dout, LANE))
        head_w = jnp.einsum('nm,co->ncmo', eye_n, self.w_out).reshape(
            n * c, self.n_dout)
        head_b = jnp.tile(self.b_out, n).reshape(1, self.n_dout)
        pad = self.n_dout_pad - self.n_dout
        self.head_w_big = jnp.pad(head_w, ((0, 0), (0, pad))).astype(jnp.bfloat16)
        self.head_b_big = jnp.pad(head_b, ((0, 0), (0, pad)))
        # Stacked AGCN params (folded with the supports at call time, under jit).
        self.agcn_w_stack = jnp.stack(self.agcn_w, 0)            # (L, 2K*C, C)
        self.agcn_b_big = jnp.stack([jnp.tile(bias, n) for bias in self.agcn_b],
                                    0).reshape(b_layers, 1, n * c)

    def __call__(self, x, y_cov, supports):
        b, t, n, cin = x.shape
        assert n == self.num_nodes and cin == self.input_dim
        c, dout = self.d_model, self.output_dim

        # --- flatten to lane-dense slabs, pad BT to the tile size -----------
        bt = b * t
        tile_bt = _pick_bt_tile(bt, n * c, self.n_dout_pad)
        bt_pad = _round_up(bt, tile_bt)
        x_flat = x.reshape(bt, n * cin)
        if bt_pad != bt:
            x_flat = jnp.pad(x_flat, ((0, bt_pad - bt), (0, 0)))

        cur_f, h_f, o_f = _gct_forward_jit(
            x_flat, tuple(supports), self.emb_w_big, self.emb_b_big,
            self.agcn_w_stack, self.agcn_b_big, self.head_w_big, self.head_b_big,
            cheb_k=self.cheb_k, tile_bt=tile_bt)

        current_inputs = cur_f[:bt].reshape(b, t, n, c)
        h_expert = h_f[:bt].reshape(b, t, n, c)
        o_expert = o_f[:bt, :self.n_dout].reshape(b, t, n, dout)
        return o_expert, h_expert, current_inputs


# ----------------------------------------------------------------------------
# Plain-JAX reference (mirrors the original module structure) for checking
# ----------------------------------------------------------------------------
def _reference_forward(model, x, supports):
    b, t, n, _ = x.shape
    cur = jnp.einsum('btnc,cd->btnd', x, model.w_emb) + model.b_emb
    supp_stack = build_support_set(supports, model.cheb_k)
    h = cur
    for l in range(model.b_layers):
        xg = jnp.einsum('knm,btmc->btnkc', supp_stack, h)       # concat order: k-major
        xg = xg.reshape(b, t, n, -1)
        h = jnp.einsum('btni,io->btno', xg, model.agcn_w[l]) + model.agcn_b[l]
    o = jnp.einsum('btnc,co->btno', h, model.w_out) + model.b_out
    return o, h, cur


# ----------------------------------------------------------------------------
# Main
# ----------------------------------------------------------------------------
if __name__ == "__main__":
    # Small, module-consistent shapes.
    num_nodes, dim_in, dim_out = 8, 2, 1
    cheb_k, d_model = 2, 32
    seq_len, out_len = 8, 4
    b_layers, top_k, d_ff, num_kernels = 1, 2, 32, 2
    B = 2

    root = jax.random.PRNGKey(0)
    k_mod, k_x, k_ycov, k_s0, k_s1 = jax.random.split(root, 5)

    model = GCTblockEncPallas(k_mod, num_nodes, dim_in, dim_out, cheb_k, d_model,
                              seq_len, out_len, b_layers, top_k, d_ff, num_kernels)

    x = jax.random.normal(k_x, (B, seq_len, num_nodes, dim_in), dtype=jnp.float32)
    y_cov = jax.random.normal(k_ycov, (B, out_len, num_nodes, dim_in),
                              dtype=jnp.float32)
    # Two row-normalized random adjacency supports.
    s0 = jax.nn.softmax(jax.random.normal(k_s0, (num_nodes, num_nodes)), axis=-1)
    s1 = jax.nn.softmax(jax.random.normal(k_s1, (num_nodes, num_nodes)), axis=-1)
    supports = [s0, s1]

    o_expert, h_expert, current_inputs = model(x, y_cov, supports)
    jax.block_until_ready((o_expert, h_expert, current_inputs))

    assert o_expert.shape == (B, seq_len, num_nodes, dim_out)
    assert h_expert.shape == (B, seq_len, num_nodes, d_model)
    assert current_inputs.shape == (B, seq_len, num_nodes, d_model)

    # Numerical sanity check against the plain-JAX reference (bf16 matmuls ->
    # loose tolerance).
    o_ref, h_ref, cur_ref = _reference_forward(model, x, supports)
    assert jnp.allclose(current_inputs, cur_ref, rtol=3e-2, atol=3e-2)
    assert jnp.allclose(h_expert, h_ref, rtol=3e-2, atol=3e-2)
    assert jnp.allclose(o_expert, o_ref, rtol=3e-2, atol=3e-2)

    print("KERNEL_OK")
</pallas_src>

<mosaic_0001>
module attributes {stable_mosaic.version = 11 : i64} {
  func.func @_gct_fused_kernel(%arg0: i32, %arg1: memref<16x16xf32, #tpu.memory_space<vmem>>, %arg2: memref<16x256xf32, #tpu.memory_space<vmem>>, %arg3: memref<1x256xf32, #tpu.memory_space<vmem>>, %arg4: memref<1x256x256xbf16, #tpu.memory_space<vmem>>, %arg5: memref<1x1x256xf32, #tpu.memory_space<vmem>>, %arg6: memref<256x128xbf16, #tpu.memory_space<vmem>>, %arg7: memref<1x128xf32, #tpu.memory_space<vmem>>, %arg8: memref<16x256xf32, #tpu.memory_space<vmem>>, %arg9: memref<16x256xf32, #tpu.memory_space<vmem>>, %arg10: memref<16x128xf32, #tpu.memory_space<vmem>>) attributes {dimension_semantics = [#tpu.dimension_semantics<parallel>], iteration_bounds = array<i64: 1>, scalar_prefetch = 0 : i64, scratch_operands = 0 : i64, tpu.core_type = #tpu.core_type<tc>, window_params = [{transform_indices = @transform_0, window_bounds = array<i64: 16, 16>}, {pipeline_mode = #tpu.pipeline_mode<synchronous>, transform_indices = @transform_1, window_bounds = array<i64: 16, 256>}, {pipeline_mode = #tpu.pipeline_mode<synchronous>, transform_indices = @transform_2, window_bounds = array<i64: 1, 256>}, {pipeline_mode = #tpu.pipeline_mode<synchronous>, transform_indices = @transform_3, window_bounds = array<i64: 1, 256, 256>}, {pipeline_mode = #tpu.pipeline_mode<synchronous>, transform_indices = @transform_4, window_bounds = array<i64: 1, 1, 256>}, {pipeline_mode = #tpu.pipeline_mode<synchronous>, transform_indices = @transform_5, window_bounds = array<i64: 256, 128>}, {pipeline_mode = #tpu.pipeline_mode<synchronous>, transform_indices = @transform_6, window_bounds = array<i64: 1, 128>}, {transform_indices = @transform_7, window_bounds = array<i64: 16, 256>}, {transform_indices = @transform_8, window_bounds = array<i64: 16, 256>}, {transform_indices = @transform_9, window_bounds = array<i64: 16, 128>}]} {
    %c0 = arith.constant 0 : index
    %c0_0 = arith.constant 0 : index
    %0 = vector.load %arg1[%c0, %c0_0] : memref<16x16xf32, #tpu.memory_space<vmem>>, vector<16x16xf32>
    %c0_1 = arith.constant 0 : index
    %c0_2 = arith.constant 0 : index
    %1 = vector.load %arg2[%c0_1, %c0_2] : memref<16x256xf32, #tpu.memory_space<vmem>>, vector<16x256xf32>
    %cst = arith.constant dense<0.000000e+00> : vector<16x256xf32>
    %2 = tpu.matmul %0, %1, %cst {dimension_numbers = #tpu.dot_dimension_numbers<[1], [0], [0], [1], [0, 0, 1, 1], [], []>} : vector<16x16xf32>, vector<16x256xf32>, vector<16x256xf32> -> vector<16x256xf32>
    %c0_3 = arith.constant 0 : index
    %c0_4 = arith.constant 0 : index
    %3 = vector.load %arg3[%c0_3, %c0_4] : memref<1x256xf32, #tpu.memory_space<vmem>>, vector<1x256xf32>
    %4 = vector.broadcast %3 : vector<1x256xf32> to vector<16x256xf32>
    %5 = arith.addf %2, %4 : vector<16x256xf32>
    %c0_5 = arith.constant 0 : index
    %c0_6 = arith.constant 0 : index
    %6 = vector.load %arg8[%c0_5, %c0_6] : memref<16x256xf32, #tpu.memory_space<vmem>>, vector<16x256xf32>
    tpu.vector_store %arg8[%c0_5, %c0_6], %5 {strides = array<i32>} : memref<16x256xf32, #tpu.memory_space<vmem>>, vector<16x256xf32>,
    %7 = arith.truncf %5 : vector<16x256xf32> to vector<16x256xbf16>
    %c0_7 = arith.constant 0 : index
    %c0_8 = arith.constant 0 : index
    %c0_9 = arith.constant 0 : index
    %8 = vector.load %arg4[%c0_7, %c0_8, %c0_9] : memref<1x256x256xbf16, #tpu.memory_space<vmem>>, vector<1x256x256xbf16>
    %9 = vector.shape_cast %8 : vector<1x256x256xbf16> to vector<256x256xbf16>
    %cst_10 = arith.constant dense<0.000000e+00> : vector<16x256xf32>
    %10 = tpu.matmul %7, %9, %cst_10 {dimension_numbers = #tpu.dot_dimension_numbers<[1], [0], [0], [1], [0, 0, 1, 1], [], []>} : vector<16x256xbf16>, vector<256x256xbf16>, vector<16x256xf32> -> vector<16x256xf32>
    %c0_11 = arith.constant 0 : index
    %c0_12 = arith.constant 0 : index
    %c0_13 = arith.constant 0 : index
    %11 = vector.load %arg5[%c0_11, %c0_12, %c0_13] : memref<1x1x256xf32, #tpu.memory_space<vmem>>, vector<1x1x256xf32>
    %12 = vector.shape_cast %11 : vector<1x1x256xf32> to vector<1x256xf32>
    %13 = vector.broadcast %12 : vector<1x256xf32> to vector<16x256xf32>
    %14 = arith.addf %10, %13 : vector<16x256xf32>
    %c0_14 = arith.constant 0 : index
    %c0_15 = arith.constant 0 : index
    %15 = vector.load %arg9[%c0_14, %c0_15] : memref<16x256xf32, #tpu.memory_space<vmem>>, vector<16x256xf32>
    tpu.vector_store %arg9[%c0_14, %c0_15], %14 {strides = array<i32>} : memref<16x256xf32, #tpu.memory_space<vmem>>, vector<16x256xf32>,
    %16 = arith.truncf %14 : vector<16x256xf32> to vector<16x256xbf16>
    %c0_16 = arith.constant 0 : index
    %c0_17 = arith.constant 0 : index
    %17 = vector.load %arg6[%c0_16, %c0_17] : memref<256x128xbf16, #tpu.memory_space<vmem>>, vector<256x128xbf16>
    %cst_18 = arith.constant dense<0.000000e+00> : vector<16x128xf32>
    %18 = tpu.matmul %16, %17, %cst_18 {dimension_numbers = #tpu.dot_dimension_numbers<[1], [0], [0], [1], [0, 0, 1, 1], [], []>} : vector<16x256xbf16>, vector<256x128xbf16>, vector<16x128xf32> -> vector<16x128xf32>
    %c0_19 = arith.constant 0 : index
    %c0_20 = arith.constant 0 : index
    %19 = vector.load %arg7[%c0_19, %c0_20] : memref<1x128xf32, #tpu.memory_space<vmem>>, vector<1x128xf32>
    %20 = vector.broadcast %19 : vector<1x128xf32> to vector<16x128xf32>
    %21 = arith.addf %18, %20 : vector<16x128xf32>
    %c0_21 = arith.constant 0 : index
    %c0_22 = arith.constant 0 : index
    %22 = vector.load %arg10[%c0_21, %c0_22] : memref<16x128xf32, #tpu.memory_space<vmem>>, vector<16x128xf32>
    tpu.vector_store %arg10[%c0_21, %c0_22], %21 {strides = array<i32>} : memref<16x128xf32, #tpu.memory_space<vmem>>, vector<16x128xf32>,
    return
  }
  func.func @transform_0(%arg0: i32) -> (i32, i32) {
    %c0_i32 = arith.constant 0 : i32
    %c0_i32_0 = arith.constant 0 : i32
    return %arg0, %c0_i32 : i32, i32
  }
  func.func @transform_1(%arg0: i32) -> (i32, i32) {
    %c0_i32 = arith.constant 0 : i32
    %c0_i32_0 = arith.constant 0 : i32
    %c0_i32_1 = arith.constant 0 : i32
    return %c0_i32, %c0_i32_0 : i32, i32
  }
  func.func @transform_2(%arg0: i32) -> (i32, i32) {
    %c0_i32 = arith.constant 0 : i32
    %c0_i32_0 = arith.constant 0 : i32
    %c0_i32_1 = arith.constant 0 : i32
    return %c0_i32, %c0_i32_0 : i32, i32
  }
  func.func @transform_3(%arg0: i32) -> (i32, i32, i32) {
    %c0_i32 = arith.constant 0 : i32
    %c0_i32_0 = arith.constant 0 : i32
    %c0_i32_1 = arith.constant 0 : i32
    %c0_i32_2 = arith.constant 0 : i32
    return %c0_i32, %c0_i32_0, %c0_i32_1 : i32, i32, i32
  }
  func.func @transform_4(%arg0: i32) -> (i32, i32, i32) {
    %c0_i32 = arith.constant 0 : i32
    %c0_i32_0 = arith.constant 0 : i32
    %c0_i32_1 = arith.constant 0 : i32
    %c0_i32_2 = arith.constant 0 : i32
    return %c0_i32, %c0_i32_0, %c0_i32_1 : i32, i32, i32
  }
  func.func @transform_5(%arg0: i32) -> (i32, i32) {
    %c0_i32 = arith.constant 0 : i32
    %c0_i32_0 = arith.constant 0 : i32
    %c0_i32_1 = arith.constant 0 : i32
    return %c0_i32, %c0_i32_0 : i32, i32
  }
  func.func @transform_6(%arg0: i32) -> (i32, i32) {
    %c0_i32 = arith.constant 0 : i32
    %c0_i32_0 = arith.constant 0 : i32
    %c0_i32_1 = arith.constant 0 : i32
    return %c0_i32, %c0_i32_0 : i32, i32
  }
  func.func @transform_7(%arg0: i32) -> (i32, i32) {
    %c0_i32 = arith.constant 0 : i32
    %c0_i32_0 = arith.constant 0 : i32
    return %arg0, %c0_i32 : i32, i32
  }
  func.func @transform_8(%arg0: i32) -> (i32, i32) {
    %c0_i32 = arith.constant 0 : i32
    %c0_i32_0 = arith.constant 0 : i32
    return %arg0, %c0_i32 : i32, i32
  }
  func.func @transform_9(%arg0: i32) -> (i32, i32) {
    %c0_i32 = arith.constant 0 : i32
    %c0_i32_0 = arith.constant 0 : i32
    return %arg0, %c0_i32 : i32, i32
  }
}

</mosaic_0001>

<llo_original>
// kernel: _gct_forward_jit.1
$region0: #{_gct_forward_jit.1}
  #allocation0 [shape = 'u32[]', space=smem, size = 0x4, offset = 0x4, fixed_abs, tag = 'smem constant byte address 0x4 - core index']
  #allocation1 [shape = 'u32[144,128]{1,0:T(1,128)}', space=vmem, size = 0x12000, scoped, tag = 'internal scratch']
  %s0 = inlined_call_operand.vmem [shape: f32[16,16], index: 0, kind: input, shape index: {}]
  %s1 = inlined_call_operand.vmem [shape: f32[16,256], index: 1, kind: input, shape index: {}]
  %s2 = inlined_call_operand.vmem [shape: f32[1,256], index: 2, kind: input, shape index: {}]
  %s3 = inlined_call_operand.vmem [shape: bf16[1,256,256], index: 3, kind: input, shape index: {}]
  %s4 = inlined_call_operand.vmem [shape: f32[1,1,256], index: 4, kind: input, shape index: {}]
  %s5 = inlined_call_operand.vmem [shape: bf16[256,128], index: 5, kind: input, shape index: {}]
  %s6 = inlined_call_operand.vmem [shape: f32[1,128], index: 6, kind: input, shape index: {}]
  %s7 = inlined_call_operand.hbm [shape: f32[16,256], index: 7, kind: output, shape index: {0}]
  %s8 = inlined_call_operand.hbm [shape: f32[16,256], index: 8, kind: output, shape index: {1}]
  %s9 = inlined_call_operand.hbm [shape: f32[16,128], index: 9, kind: output, shape index: {2}]
  %10 = xla_tuple %s7, %s8, %s9
  %s11 = sld [smem:[#allocation0]]
  $region54: #{_gct_forward_jit.1} parent=0
    _
  %s13 = ssub.s32 1, %s11
  %s14 = scalar_select 0, %s13, %s11
  $region1: #{_gct_forward_jit.1} parent=0
    #allocation2 [shape = 'u8[16384]{0}', space=vmem, size = 0x4000, scoped, tag = 'output window, operand 0, single buffered']
    #allocation3 [shape = 's32[1]{0}', space=sflag, size = 0x4, scoped, tag = 'scoped memory for _gct_forward_jit.1']
    #allocation4 [shape = 'u8[16384]{0}', space=vmem, size = 0x4000, scoped, tag = 'output window, operand 1, single buffered']
    #allocation5 [shape = 's32[1]{0}', space=sflag, size = 0x4, scoped, tag = 'scoped memory for _gct_forward_jit.1']
    #allocation6 [shape = 'u8[8192]{0}', space=vmem, size = 0x2000, scoped, tag = 'output window, operand 2, single buffered']
    %15 = vsyncpa [#allocation3], 0
    %16 = vsyncpa [#allocation5], 0
    // Predicated region
    $region2: #{_gct_forward_jit.1} parent=1 // pred_check
      _
    $region3: #{_gct_forward_jit.1} parent=1 // pred_check_branch
      %18 = sbr.rel (0) target = $region5
    $region4: #{_gct_forward_jit.1} parent=1 // pred_region
      _
    $region5: #{_gct_forward_jit.1} parent=1 // pred_fallthru
      _
    // Predicated region
    $region6: #{_gct_forward_jit.1} parent=1 // pred_check
      _
    $region7: #{_gct_forward_jit.1} parent=1 // pred_check_branch
      %20 = sbr.rel (0) target = $region9
    $region8: #{_gct_forward_jit.1} parent=1 // pred_region
      _
    $region9: #{_gct_forward_jit.1} parent=1 // pred_fallthru
      _
    // Predicated region
    $region10: #{_gct_forward_jit.1} parent=1 // pred_check
      _
    $region11: #{_gct_forward_jit.1} parent=1 // pred_check_branch
      %22 = sbr.rel (0) target = $region13
    $region12: #{_gct_forward_jit.1} parent=1 // pred_region
      _
    $region13: #{_gct_forward_jit.1} parent=1 // pred_fallthru
      _
    // Predicated region
    $region14: #{_gct_forward_jit.1} parent=1 // pred_check
      _
    $region15: #{_gct_forward_jit.1} parent=1 // pred_check_branch
      %24 = sbr.rel (0) target = $region17
    $region16: #{_gct_forward_jit.1} parent=1 // pred_region
      _
    $region17: #{_gct_forward_jit.1} parent=1 // pred_fallthru
      _
    // Predicated region
    $region18: #{_gct_forward_jit.1} parent=1 // pred_check
      _
    $region19: #{_gct_forward_jit.1} parent=1 // pred_check_branch
      %26 = sbr.rel (0) target = $region21
    $region20: #{_gct_forward_jit.1} parent=1 // pred_region
      _
    $region21: #{_gct_forward_jit.1} parent=1 // pred_fallthru
      _
    // Predicated region
    $region22: #{_gct_forward_jit.1} parent=1 // pred_check
      _
    $region23: #{_gct_forward_jit.1} parent=1 // pred_check_branch
      %28 = sbr.rel (0) target = $region25
    $region24: #{_gct_forward_jit.1} parent=1 // pred_region
      _
    $region25: #{_gct_forward_jit.1} parent=1 // pred_fallthru
      _
    // Predicated region
    $region26: #{_gct_forward_jit.1} parent=1 // pred_check
      _
    $region27: #{_gct_forward_jit.1} parent=1 // pred_check_branch
      %30 = sbr.rel (0) target = $region29
    $region28: #{_gct_forward_jit.1} parent=1 // pred_region
      _
    $region29: #{_gct_forward_jit.1} parent=1 // pred_fallthru
      _
    %v32 = vld [vmem:[%s0] sm:$0xff]
    %v33 = vld [vmem:[%s0 + $0x8] sm:$0xff]
    %v34 = vld [vmem:[%s1] sm:$0xff]
    %v35 = vld [vmem:[%s1 + $0x8] sm:$0xff]
    %v36 = vld [vmem:[%s1 + $0x10] sm:$0xff]
    %v37 = vld [vmem:[%s1 + $0x18] sm:$0xff]
    %v38 = vld [vmem:[%s2] sm:$0x3]
    %v40 = vlaneseq
    %v41 = vshrl.u32 %v40, 7
    %v42 = vsub.s32 0, %v41
    %v43 = vrot.slane %v38, %v42
    %v44 = vlaneseq
    %v45 = vshrl.u32 %v44, 7
    %v46 = vsub.s32 1, %v45
    %v47 = vrot.slane %v38, %v46
    %vm50 = vcmask 130048
    %v52 = vsel %vm50, %v32, 0
    %v55 = vsel %vm50, %v33, 0
    %57 = vmatprep.subr.mxu0 0.0
    %58 = vmatpush1.msra.mxu0 0.0
    %59 = vmatprep.subr.mxu0 0.0
    %60 = vmatpush1.msra.mxu0 0.0
    %61 = vmatprep.subr.mxu0 0.0
    %62 = vmatpush1.msra.mxu0 0.0
    %63 = vmatprep.subr.mxu0 0.0
    %64 = vmatpush1.msra.mxu0 0.0
    %65 = vmatprep.subr.mxu0 0.0
    %66 = vmatpush1.msra.mxu0 0.0
    %67 = vmatprep.subr.mxu0 0.0
    %68 = vmatpush1.msra.mxu0 0.0
    %69 = vmatprep.subr.mxu0 0.0
    %70 = vmatpush1.msra.mxu0 0.0
    %71 = vmatprep.subr.mxu0 0.0
    %72 = vmatpush1.msra.mxu0 0.0
    %73 = vmatprep.subr.mxu0 0.0
    %74 = vmatpush1.msra.mxu0 0.0
    %75 = vmatprep.subr.mxu0 0.0
    %76 = vmatpush1.msra.mxu0 0.0
    %77 = vmatprep.subr.mxu0 0.0
    %78 = vmatpush1.msra.mxu0 0.0
    %79 = vmatprep.subr.mxu0 0.0
    %80 = vmatpush1.msra.mxu0 0.0
    %81 = vmatprep.subr.mxu0 0.0
    %82 = vmatpush1.msra.mxu0 0.0
    %83 = vmatprep.subr.mxu0 0.0
    %84 = vmatpush1.msra.mxu0 0.0
    %85 = vmatprep.subr.mxu0 %v37
    %86 = vmatpush1.msra.mxu0 %v36
    %87 = vmatprep.subr.mxu0 %v35
    %88 = vmatpush1.msra.mxu0 %v34
    %89 = vmatprep.subr.mxu0 0.0
    %90 = vmatpush2.msra.mxu0 0.0
    %91 = vmatprep.subr.mxu0 0.0
    %92 = vmatpush2.msra.mxu0 0.0
    %93 = vmatprep.subr.mxu0 0.0
    %94 = vmatpush2.msra.mxu0 0.0
    %95 = vmatprep.subr.mxu0 0.0
    %96 = vmatpush2.msra.mxu0 0.0
    %97 = vmatprep.subr.mxu0 0.0
    %98 = vmatpush2.msra.mxu0 0.0
    %99 = vmatprep.subr.mxu0 0.0
    %100 = vmatpush2.msra.mxu0 0.0
    %101 = vmatprep.subr.mxu0 0.0
    %102 = vmatpush2.msra.mxu0 0.0
    %103 = vmatprep.subr.mxu0 0.0
    %104 = vmatpush2.msra.mxu0 0.0
    %105 = vmatprep.subr.mxu0 0.0
    %106 = vmatpush2.msra.mxu0 0.0
    %107 = vmatprep.subr.mxu0 0.0
    %108 = vmatpush2.msra.mxu0 0.0
    %109 = vmatprep.subr.mxu0 0.0
    %110 = vmatpush2.msra.mxu0 0.0
    %111 = vmatprep.subr.mxu0 0.0
    %112 = vmatpush2.msra.mxu0 0.0
    %113 = vmatprep.subr.mxu0 0.0
    %114 = vmatpush2.msra.mxu0 0.0
    %115 = vmatprep.subr.mxu0 0.0
    %116 = vmatpush2.msra.mxu0 0.0
    %117 = vmatprep.subr.mxu0 0.0
    %118 = vmatpush2.msra.mxu0 0.0
    %119 = vmatprep.subr.mxu0 0.0
    %120 = vmatpush2.msra.mxu0 0.0
    %121 = vmatprep.mubr.f32.mxu0 0.0
    %122 = vmatmul.mubr.f32.gmra.mxu0 %v52
    %v123 = vpop.f32.mrf.mxu0
    %v124 = vadd.f32 %v43, %v123
    %v125 = vpop.f32.mrf.mxu0
    %v126 = vadd.f32 %v47, %v125
    %127 = vmatprep.mubr.f32.mxu0 0.0
    %128 = vmatmul.mubr.f32.gmra.mxu0 %v55
    %v129 = vpop.f32.mrf.mxu0
    %v130 = vadd.f32 %v43, %v129
    %v131 = vpop.f32.mrf.mxu0
    %v132 = vadd.f32 %v47, %v131
    %133 = vdwg.mxu0
    %134 = vst [vmem:[#allocation2] sm:$0xff] %v124
    %135 = vst [vmem:[#allocation2 + $0x8] sm:$0xff] %v126
    %136 = vst [vmem:[#allocation2 + $0x10] sm:$0xff] %v130
    %137 = vst [vmem:[#allocation2 + $0x18] sm:$0xff] %v132
    %v138 = vpack.c.bf16 %v130, %v124
    %v139 = vpack.c.bf16 %v132, %v126
    %v140 = vld [vmem:[%s3] sm:$0xff]
    %v141 = vld [vmem:[%s3 + $0x8] sm:$0xff]
    %v142 = vld [vmem:[%s3 + $0x10] sm:$0xff]
    %v143 = vld [vmem:[%s3 + $0x18] sm:$0xff]
    %v144 = vld [vmem:[%s3 + $0x20] sm:$0xff]
    %v145 = vld [vmem:[%s3 + $0x28] sm:$0xff]
    %v146 = vld [vmem:[%s3 + $0x30] sm:$0xff]
    %v147 = vld [vmem:[%s3 + $0x38] sm:$0xff]
    %v148 = vld [vmem:[%s3 + $0x40] sm:$0xff]
    %v149 = vld [vmem:[%s3 + $0x48] sm:$0xff]
    %v150 = vld [vmem:[%s3 + $0x50] sm:$0xff]
    %v151 = vld [vmem:[%s3 + $0x58] sm:$0xff]
    %v152 = vld [vmem:[%s3 + $0x60] sm:$0xff]
    %v153 = vld [vmem:[%s3 + $0x68] sm:$0xff]
    %v154 = vld [vmem:[%s3 + $0x70] sm:$0xff]
    %v155 = vld [vmem:[%s3 + $0x78] sm:$0xff]
    %v156 = vld [vmem:[%s3 + $0x80] sm:$0xff]
    %v157 = vld [vmem:[%s3 + $0x88] sm:$0xff]
    %v158 = vld [vmem:[%s3 + $0x90] sm:$0xff]
    %v159 = vld [vmem:[%s3 + $0x98] sm:$0xff]
    %v160 = vld [vmem:[%s3 + $0xa0] sm:$0xff]
    %v161 = vld [vmem:[%s3 + $0xa8] sm:$0xff]
    %v162 = vld [vmem:[%s3 + $0xb0] sm:$0xff]
    %v163 = vld [vmem:[%s3 + $0xb8] sm:$0xff]
    %v164 = vld [vmem:[%s3 + $0xc0] sm:$0xff]
    %v165 = vld [vmem:[%s3 + $0xc8] sm:$0xff]
    %v166 = vld [vmem:[%s3 + $0xd0] sm:$0xff]
    %v167 = vld [vmem:[%s3 + $0xd8] sm:$0xff]
    %v168 = vld [vmem:[%s3 + $0xe0] sm:$0xff]
    %v169 = vld [vmem:[%s3 + $0xe8] sm:$0xff]
    %v170 = vld [vmem:[%s3 + $0xf0] sm:$0xff]
    %v171 = vld [vmem:[%s3 + $0xf8] sm:$0xff]
    %v172 = vld [vmem:[%s4] sm:$0x3]
    %v174 = vlaneseq
    %v175 = vshrl.u32 %v174, 7
    %v176 = vsub.s32 0, %v175
    %v177 = vrot.slane %v172, %v176
    %v178 = vlaneseq
    %v179 = vshrl.u32 %v178, 7
    %v180 = vsub.s32 1, %v179
    %v181 = vrot.slane %v172, %v180
    %v216 = vunpack.c.l.b16 %v140
    %v217 = vunpack.c.h.b16 %v140
    %v218 = vunpack.c.l.b16 %v141
    %v219 = vunpack.c.h.b16 %v141
    %v220 = vunpack.c.l.b16 %v142
    %v221 = vunpack.c.h.b16 %v142
    %v222 = vunpack.c.l.b16 %v143
    %v223 = vunpack.c.h.b16 %v143
    %v224 = vunpack.c.l.b16 %v144
    %v225 = vunpack.c.h.b16 %v144
    %v226 = vunpack.c.l.b16 %v145
    %v227 = vunpack.c.h.b16 %v145
    %v228 = vunpack.c.l.b16 %v146
    %v229 = vunpack.c.h.b16 %v146
    %v230 = vunpack.c.l.b16 %v147
    %v231 = vunpack.c.h.b16 %v147
    %v232 = vunpack.c.l.b16 %v148
    %v233 = vunpack.c.h.b16 %v148
    %v234 = vunpack.c.l.b16 %v149
    %v235 = vunpack.c.h.b16 %v149
    %v236 = vunpack.c.l.b16 %v150
    %v237 = vunpack.c.h.b16 %v150
    %v238 = vunpack.c.l.b16 %v151
    %v239 = vunpack.c.h.b16 %v151
    %v240 = vunpack.c.l.b16 %v152
    %v241 = vunpack.c.h.b16 %v152
    %v242 = vunpack.c.l.b16 %v153
    %v243 = vunpack.c.h.b16 %v153
    %v244 = vunpack.c.l.b16 %v154
    %v245 = vunpack.c.h.b16 %v154
    %v246 = vunpack.c.l.b16 %v155
    %v247 = vunpack.c.h.b16 %v155
    %v248 = vunpack.c.l.b16 %v156
    %v249 = vunpack.c.h.b16 %v156
    %v250 = vunpack.c.l.b16 %v157
    %v251 = vunpack.c.h.b16 %v157
    %v252 = vunpack.c.l.b16 %v158
    %v253 = vunpack.c.h.b16 %v158
    %v254 = vunpack.c.l.b16 %v159
    %v255 = vunpack.c.h.b16 %v159
    %v256 = vunpack.c.l.b16 %v160
    %v257 = vunpack.c.h.b16 %v160
    %v258 = vunpack.c.l.b16 %v161
    %v259 = vunpack.c.h.b16 %v161
    %v260 = vunpack.c.l.b16 %v162
    %v261 = vunpack.c.h.b16 %v162
    %v262 = vunpack.c.l.b16 %v163
    %v263 = vunpack.c.h.b16 %v163
    %v264 = vunpack.c.l.b16 %v164
    %v265 = vunpack.c.h.b16 %v164
    %v266 = vunpack.c.l.b16 %v165
    %v267 = vunpack.c.h.b16 %v165
    %v268 = vunpack.c.l.b16 %v166
    %v269 = vunpack.c.h.b16 %v166
    %v270 = vunpack.c.l.b16 %v167
    %v271 = vunpack.c.h.b16 %v167
    %v272 = vunpack.c.l.b16 %v168
    %v273 = vunpack.c.h.b16 %v168
    %v274 = vunpack.c.l.b16 %v169
    %v275 = vunpack.c.h.b16 %v169
    %v276 = vunpack.c.l.b16 %v170
    %v277 = vunpack.c.h.b16 %v170
    %v278 = vunpack.c.l.b16 %v171
    %v279 = vunpack.c.h.b16 %v171
    %v280 = vpack.c.b16 %v218, %v216
    %v281 = vpack.c.b16 %v219, %v217
    %v282 = vpack.c.b16 %v222, %v220
    %v283 = vpack.c.b16 %v223, %v221
    %v284 = vpack.c.b16 %v226, %v224
    %v285 = vpack.c.b16 %v227, %v225
    %v286 = vpack.c.b16 %v230, %v228
    %v287 = vpack.c.b16 %v231, %v229
    %v288 = vpack.c.b16 %v234, %v232
    %v289 = vpack.c.b16 %v235, %v233
    %v290 = vpack.c.b16 %v238, %v236
    %v291 = vpack.c.b16 %v239, %v237
    %v292 = vpack.c.b16 %v242, %v240
    %v293 = vpack.c.b16 %v243, %v241
    %v294 = vpack.c.b16 %v246, %v244
    %v295 = vpack.c.b16 %v247, %v245
    %v296 = vpack.c.b16 %v250, %v248
    %v297 = vpack.c.b16 %v251, %v249
    %v298 = vpack.c.b16 %v254, %v252
    %v299 = vpack.c.b16 %v255, %v253
    %v300 = vpack.c.b16 %v258, %v256
    %v301 = vpack.c.b16 %v259, %v257
    %v302 = vpack.c.b16 %v262, %v260
    %v303 = vpack.c.b16 %v263, %v261
    %v304 = vpack.c.b16 %v266, %v264
    %v305 = vpack.c.b16 %v267, %v265
    %v306 = vpack.c.b16 %v270, %v268
    %v307 = vpack.c.b16 %v271, %v269
    %v308 = vpack.c.b16 %v274, %v272
    %v309 = vpack.c.b16 %v275, %v273
    %v310 = vpack.c.b16 %v278, %v276
    %v311 = vpack.c.b16 %v279, %v277
    %344 = vmatprep.subr.bf16.mxu0 %v295
    %345 = vmatpush1.bf16.msra.mxu0 %v294
    %346 = vmatprep.subr.bf16.mxu0 %v293
    %347 = vmatpush1.bf16.msra.mxu0 %v292
    %348 = vmatprep.subr.bf16.mxu0 %v291
    %349 = vmatpush1.bf16.msra.mxu0 %v290
    %350 = vmatprep.subr.bf16.mxu0 %v289
    %351 = vmatpush1.bf16.msra.mxu0 %v288
    %352 = vmatprep.subr.bf16.mxu0 %v287
    %353 = vmatpush1.bf16.msra.mxu0 %v286
    %354 = vmatprep.subr.bf16.mxu0 %v285
    %355 = vmatpush1.bf16.msra.mxu0 %v284
    %356 = vmatprep.subr.bf16.mxu0 %v283
    %357 = vmatpush1.bf16.msra.mxu0 %v282
    %358 = vmatprep.subr.bf16.mxu0 %v281
    %359 = vmatpush1.bf16.msra.mxu0 %v280
    %360 = vmatprep.subr.bf16.mxu0 %v311
    %361 = vmatpush2.bf16.msra.mxu0 %v310
    %362 = vmatprep.subr.bf16.mxu0 %v309
    %363 = vmatpush2.bf16.msra.mxu0 %v308
    %364 = vmatprep.subr.bf16.mxu0 %v307
    %365 = vmatpush2.bf16.msra.mxu0 %v306
    %366 = vmatprep.subr.bf16.mxu0 %v305
    %367 = vmatpush2.bf16.msra.mxu0 %v304
    %368 = vmatprep.subr.bf16.mxu0 %v303
    %369 = vmatpush2.bf16.msra.mxu0 %v302
    %370 = vmatprep.subr.bf16.mxu0 %v301
    %371 = vmatpush2.bf16.msra.mxu0 %v300
    %372 = vmatprep.subr.bf16.mxu0 %v299
    %373 = vmatpush2.bf16.msra.mxu0 %v298
    %374 = vmatprep.subr.bf16.mxu0 %v297
    %375 = vmatpush2.bf16.msra.mxu0 %v296
    %376 = vmatprep.mubr.bf16.mxu0 %v139
    %377 = vmatmul.mubr.bf16.gmra.mxu0 %v138
    %v378 = vpop.f32.mrf.mxu0
    %v379 = vadd.f32 %v177, %v378
    %v380 = vpop.f32.mrf.mxu0
    %v381 = vadd.f32 %v181, %v380
    %v382 = vpop.f32.mrf.mxu0
    %v383 = vadd.f32 %v177, %v382
    %v384 = vpop.f32.mrf.mxu0
    %v385 = vadd.f32 %v181, %v384
    %386 = vdwg.mxu0
    %387 = vst [vmem:[#allocation4] sm:$0xff] %v379
    %388 = vst [vmem:[#allocation4 + $0x8] sm:$0xff] %v381
    %389 = vst [vmem:[#allocation4 + $0x10] sm:$0xff] %v383
    %390 = vst [vmem:[#allocation4 + $0x18] sm:$0xff] %v385
    %v391 = vpack.c.bf16 %v383, %v379
    %v392 = vpack.c.bf16 %v385, %v381
    %v393 = vld [vmem:[%s5] sm:$0xf]
    %v394 = vld [vmem:[%s5 + $0x4] sm:$0xf]
    %v395 = vld [vmem:[%s5 + $0x8] sm:$0xf]
    %v396 = vld [vmem:[%s5 + $0xc] sm:$0xf]
    %v397 = vld [vmem:[%s5 + $0x10] sm:$0xf]
    %v398 = vld [vmem:[%s5 + $0x14] sm:$0xf]
    %v399 = vld [vmem:[%s5 + $0x18] sm:$0xf]
    %v400 = vld [vmem:[%s5 + $0x1c] sm:$0xf]
    %v401 = vld [vmem:[%s5 + $0x20] sm:$0xf]
    %v402 = vld [vmem:[%s5 + $0x24] sm:$0xf]
    %v403 = vld [vmem:[%s5 + $0x28] sm:$0xf]
    %v404 = vld [vmem:[%s5 + $0x2c] sm:$0xf]
    %v405 = vld [vmem:[%s5 + $0x30] sm:$0xf]
    %v406 = vld [vmem:[%s5 + $0x34] sm:$0xf]
    %v407 = vld [vmem:[%s5 + $0x38] sm:$0xf]
    %v408 = vld [vmem:[%s5 + $0x3c] sm:$0xf]
    %v409 = vld [vmem:[%s5 + $0x40] sm:$0xf]
    %v410 = vld [vmem:[%s5 + $0x44] sm:$0xf]
    %v411 = vld [vmem:[%s5 + $0x48] sm:$0xf]
    %v412 = vld [vmem:[%s5 + $0x4c] sm:$0xf]
    %v413 = vld [vmem:[%s5 + $0x50] sm:$0xf]
    %v414 = vld [vmem:[%s5 + $0x54] sm:$0xf]
    %v415 = vld [vmem:[%s5 + $0x58] sm:$0xf]
    %v416 = vld [vmem:[%s5 + $0x5c] sm:$0xf]
    %v417 = vld [vmem:[%s5 + $0x60] sm:$0xf]
    %v418 = vld [vmem:[%s5 + $0x64] sm:$0xf]
    %v419 = vld [vmem:[%s5 + $0x68] sm:$0xf]
    %v420 = vld [vmem:[%s5 + $0x6c] sm:$0xf]
    %v421 = vld [vmem:[%s5 + $0x70] sm:$0xf]
    %v422 = vld [vmem:[%s5 + $0x74] sm:$0xf]
    %v423 = vld [vmem:[%s5 + $0x78] sm:$0xf]
    %v424 = vld [vmem:[%s5 + $0x7c] sm:$0xf]
    %v425 = vld [vmem:[%s6] sm:$0x1]
    %v427 = vlaneseq
    %v428 = vshrl.u32 %v427, 7
    %v429 = vsub.s32 0, %v428
    %v430 = vrot.slane %v425, %v429
    %v464 = vunpack.c.l.b16 %v393
    %v465 = vunpack.c.l.b16 %v394
    %v466 = vunpack.c.l.b16 %v395
    %v467 = vunpack.c.l.b16 %v396
    %v468 = vunpack.c.l.b16 %v397
    %v469 = vunpack.c.l.b16 %v398
    %v470 = vunpack.c.l.b16 %v399
    %v471 = vunpack.c.l.b16 %v400
    %v472 = vunpack.c.l.b16 %v401
    %v473 = vunpack.c.l.b16 %v402
    %v474 = vunpack.c.l.b16 %v403
    %v475 = vunpack.c.l.b16 %v404
    %v476 = vunpack.c.l.b16 %v405
    %v477 = vunpack.c.l.b16 %v406
    %v478 = vunpack.c.l.b16 %v407
    %v479 = vunpack.c.l.b16 %v408
    %v480 = vunpack.c.l.b16 %v409
    %v481 = vunpack.c.l.b16 %v410
    %v482 = vunpack.c.l.b16 %v411
    %v483 = vunpack.c.l.b16 %v412
    %v484 = vunpack.c.l.b16 %v413
    %v485 = vunpack.c.l.b16 %v414
    %v486 = vunpack.c.l.b16 %v415
    %v487 = vunpack.c.l.b16 %v416
    %v488 = vunpack.c.l.b16 %v417
    %v489 = vunpack.c.l.b16 %v418
    %v490 = vunpack.c.l.b16 %v419
    %v491 = vunpack.c.l.b16 %v420
    %v492 = vunpack.c.l.b16 %v421
    %v493 = vunpack.c.l.b16 %v422
    %v494 = vunpack.c.l.b16 %v423
    %v495 = vunpack.c.l.b16 %v424
    %v496 = vpack.c.b16 %v465, %v464
    %v497 = vpack.c.b16 %v467, %v466
    %v498 = vpack.c.b16 %v469, %v468
    %v499 = vpack.c.b16 %v471, %v470
    %v500 = vpack.c.b16 %v473, %v472
    %v501 = vpack.c.b16 %v475, %v474
    %v502 = vpack.c.b16 %v477, %v476
    %v503 = vpack.c.b16 %v479, %v478
    %v504 = vpack.c.b16 %v481, %v480
    %v505 = vpack.c.b16 %v483, %v482
    %v506 = vpack.c.b16 %v485, %v484
    %v507 = vpack.c.b16 %v487, %v486
    %v508 = vpack.c.b16 %v489, %v488
    %v509 = vpack.c.b16 %v491, %v490
    %v510 = vpack.c.b16 %v493, %v492
    %v511 = vpack.c.b16 %v495, %v494
    %528 = vmatprep.subr.bf16.mxu0 0
    %529 = vmatpush1.bf16.msra.mxu0 %v503
    %530 = vmatprep.subr.bf16.mxu0 0
    %531 = vmatpush1.bf16.msra.mxu0 %v502
    %532 = vmatprep.subr.bf16.mxu0 0
    %533 = vmatpush1.bf16.msra.mxu0 %v501
    %534 = vmatprep.subr.bf16.mxu0 0
    %535 = vmatpush1.bf16.msra.mxu0 %v500
    %536 = vmatprep.subr.bf16.mxu0 0
    %537 = vmatpush1.bf16.msra.mxu0 %v499
    %538 = vmatprep.subr.bf16.mxu0 0
    %539 = vmatpush1.bf16.msra.mxu0 %v498
    %540 = vmatprep.subr.bf16.mxu0 0
    %541 = vmatpush1.bf16.msra.mxu0 %v497
    %542 = vmatprep.subr.bf16.mxu0 0
    %543 = vmatpush1.bf16.msra.mxu0 %v496
    %544 = vmatprep.subr.bf16.mxu0 0
    %545 = vmatpush2.bf16.msra.mxu0 %v511
    %546 = vmatprep.subr.bf16.mxu0 0
    %547 = vmatpush2.bf16.msra.mxu0 %v510
    %548 = vmatprep.subr.bf16.mxu0 0
    %549 = vmatpush2.bf16.msra.mxu0 %v509
    %550 = vmatprep.subr.bf16.mxu0 0
    %551 = vmatpush2.bf16.msra.mxu0 %v508
    %552 = vmatprep.subr.bf16.mxu0 0
    %553 = vmatpush2.bf16.msra.mxu0 %v507
    %554 = vmatprep.subr.bf16.mxu0 0
    %555 = vmatpush2.bf16.msra.mxu0 %v506
    %556 = vmatprep.subr.bf16.mxu0 0
    %557 = vmatpush2.bf16.msra.mxu0 %v505
    %558 = vmatprep.subr.bf16.mxu0 0
    %559 = vmatpush2.bf16.msra.mxu0 %v504
    %560 = vmatprep.mubr.bf16.mxu0 %v392
    %561 = vmatmul.mubr.bf16.gmra.mxu0 %v391
    %v562 = vpop.f32.mrf.mxu0
    %v563 = vadd.f32 %v430, %v562
    %v564 = vpop.f32.mrf.mxu0
    %v565 = vpop.f32.mrf.mxu0
    %v566 = vadd.f32 %v430, %v565
    %v567 = vpop.f32.mrf.mxu0
    %568 = vdwg.mxu0
    %569 = vst [vmem:[#allocation6] sm:$0xff] %v563
    %570 = vst [vmem:[#allocation6 + $0x8] sm:$0xff] %v566
    // Predicated region
    $region30: #{_gct_forward_jit.1} parent=1 // pred_check
      _
    $region31: #{_gct_forward_jit.1} parent=1 // pred_check_branch
      %572 = sbr.rel (0) target = $region33
    $region32: #{_gct_forward_jit.1} parent=1 // pred_region
      %s574 = ssub.s32 512, 512
      %575 = vsyncadd [#allocation3], %s574
      %s576 = sshll.u32 [#allocation2], 4
      %s577 = int_to_ptr.vmem [resolvable:$true] %s576
      %582 = dma.vmem_to_hbm [thread:$0]  %s577, 512, %s7, [#allocation3], 256, 256, 16
    $region33: #{_gct_forward_jit.1} parent=1 // pred_fallthru
      _
    // Predicated region
    $region34: #{_gct_forward_jit.1} parent=1 // pred_check
      _
    $region35: #{_gct_forward_jit.1} parent=1 // pred_check_branch
      %584 = sbr.rel (0) target = $region37
    $region36: #{_gct_forward_jit.1} parent=1 // pred_region
      %s586 = ssub.s32 512, 512
      %587 = vsyncadd [#allocation5], %s586
      %s588 = sshll.u32 [#allocation4], 4
      %s589 = int_to_ptr.vmem [resolvable:$true] %s588
      %594 = dma.vmem_to_hbm [thread:$0]  %s589, 512, %s8, [#allocation5], 256, 256, 16
    $region37: #{_gct_forward_jit.1} parent=1 // pred_fallthru
      _
    // Predicated region
    $region38: #{_gct_forward_jit.1} parent=1 // pred_check
      _
    $region39: #{_gct_forward_jit.1} parent=1 // pred_check_branch
      %596 = sbr.rel (0) target = $region41
    $region40: #{_gct_forward_jit.1} parent=1 // pred_region
      %s598 = ssub.s32 256, 256
      %599 = vsyncadd [#allocation5], %s598
      %s600 = sshll.u32 [#allocation6], 4
      %s601 = int_to_ptr.vmem [resolvable:$true] %s600
      %606 = dma.vmem_to_hbm [thread:$0]  %s601, 256, %s9, [#allocation5], 128, 128, 8
    $region41: #{_gct_forward_jit.1} parent=1 // pred_fallthru
      _
    // Predicated region
    $region42: #{_gct_forward_jit.1} parent=1 // pred_check
      _
    $region43: #{_gct_forward_jit.1} parent=1 // pred_check_branch
      %608 = sbr.rel (0) target = $region45
    $region44: #{_gct_forward_jit.1} parent=1 // pred_region
      %609 = dma.done [#allocation3], 512
    $region45: #{_gct_forward_jit.1} parent=1 // pred_fallthru
      _
    // Predicated region
    $region46: #{_gct_forward_jit.1} parent=1 // pred_check
      _
    $region47: #{_gct_forward_jit.1} parent=1 // pred_check_branch
      %611 = sbr.rel (0) target = $region49
    $region48: #{_gct_forward_jit.1} parent=1 // pred_region
      %612 = dma.done [#allocation5], 512
    $region49: #{_gct_forward_jit.1} parent=1 // pred_fallthru
      _
    // Predicated region
    $region50: #{_gct_forward_jit.1} parent=1 // pred_check
      _
    $region51: #{_gct_forward_jit.1} parent=1 // pred_check_branch
      %614 = sbr.rel (0) target = $region53
    $region52: #{_gct_forward_jit.1} parent=1 // pred_region
      %615 = dma.done [#allocation5], 256
    $region53: #{_gct_forward_jit.1} parent=1 // pred_fallthru
      _
    %616 = vsyncpa [#allocation3], 1
    %617 = vsyncpa [#allocation5], 1

</llo_original>
